<compile_context>
chip_gen: v7x
topology: tpu7x:2x2x1
jax: 0.10.0
libtpu: 0.0.40
codegen_flags: <defaults>
</compile_context>

<pallas_src>
import functools

import jax
import jax.numpy as jnp
from jax.experimental import pallas as pl
from jax.experimental.pallas import tpu as pltpu
from jax.scipy.linalg import block_diag


def _feature_attention_kernel(x_ref, w1_ref, b1_ref, w2_ref, b2_ref, o_ref, *, act_dtype):
    x = x_ref[...]                                                       # (TB, 128), storage dtype
    # h = relu(x @ W1_bd + b1): MXU matmul, f32 accumulate.  The block-diagonal weights keep the
    # packed rows independent while presenting a K=128 contraction to the MXU.
    h = jnp.dot(x, w1_ref[...], preferred_element_type=jnp.float32)      # (TB, G*H) f32
    h = jnp.maximum(h + b1_ref[...], 0.0)
    # attn logits = h @ W2_bd + b2 (second matmul fed in the weight dtype: bf16 or f32).
    logits = jnp.dot(h.astype(w2_ref.dtype), w2_ref[...],
                     preferred_element_type=jnp.float32)                 # (TB, 128) f32
    # Sigmoid + gating in act_dtype: f32 on the f32 path (v5e-safe), bf16 on the bf16 storage
    # path where the v6e/v7x EUP runs bf16 at ~2x the f32 rate.
    attn = jax.nn.sigmoid((logits + b2_ref[...]).astype(act_dtype))
    # Folded residual: x*attn + x == x*(attn + 1).
    o_ref[...] = (x.astype(act_dtype) * (attn + 1.0)).astype(o_ref.dtype)


def _feature_attention_jnp(x2, w1, b1, w2, b2):
    """Fused-XLA fast path (tiny batches / non-packing in_dim)."""
    f32 = jnp.float32
    xf = x2.astype(f32)
    h = jnp.maximum(xf @ w1.T.astype(f32) + b1.astype(f32), 0.0)
    a = jax.nn.sigmoid(h @ w2.T.astype(f32) + b2.astype(f32))
    return (xf * (a + 1.0)).astype(x2.dtype)


def feature_attention(x, w1, b1, w2, b2, *, block_rows=4096, min_pallas_batch=512):
    """FeatureAttention forward.

    x : (..., D)           -- input feature vectors (f32 or bf16)
    w1: (H, D), b1: (H,)   -- nn.Linear(in_dim, in_dim // reduction) weight / bias (PyTorch layout)
    w2: (D, H), b2: (D,)   -- nn.Linear(in_dim // reduction, in_dim) weight / bias (PyTorch layout)
    Returns x * sigmoid(relu(x @ w1.T + b1) @ w2.T + b2) + x
    """
    orig_shape = x.shape
    D = orig_shape[-1]
    H = w1.shape[0]
    dtype = x.dtype
    x2 = x.reshape(-1, D)
    B = x2.shape[0]

    # Tiny batches (kernel-launch dominated) or in_dims that don't pack into the 128-lane vreg
    # go through fused XLA instead of a kernel launch.
    # TODO(synk): add a lane-transposed Pallas fallback for in_dims that don't divide 128.
    if B < min_pallas_batch or D > 128 or 128 % D != 0:
        return _feature_attention_jnp(x2, w1, b1, w2, b2).reshape(orig_shape)

    G = 128 // D                        # original rows packed per 128-lane row (4 for D=32)
    GH, GD = G * H, G * D

    # Pad the batch to a multiple of G only when strictly needed (rare; one extra copy of x).
    B_pad = pl.cdiv(B, G) * G
    xp = jnp.pad(x2, ((0, B_pad - B), (0, 0))) if B_pad != B else x2
    R = B_pad // G
    xr = xp.reshape(R, GD)              # free: row-major contiguous reshape, no transpose

    f32 = jnp.float32
    # Block-diagonal packed weights (tiny; built once per call, VMEM-resident across the grid).
    w1_bd = block_diag(*([w1.T.astype(f32)] * G)).astype(dtype)    # (GD, GH)
    w2_bd = block_diag(*([w2.T.astype(f32)] * G)).astype(dtype)    # (GH, GD)
    b1_bd = jnp.tile(b1.astype(f32), G).reshape(1, GH)             # biases kept f32
    b2_bd = jnp.tile(b2.astype(f32), G).reshape(1, GD)

    # Batch tile: large enough that DMA (not the ~0.35 us/step overhead) dominates, >= 2 grid
    # steps when there is real work so a v7x megacore can split it, rounded to a sublane
    # multiple (or the full extent, which is exempt from the (8, 128) rule).
    n_steps = max(1, pl.cdiv(R, block_rows))
    if n_steps == 1 and R >= 16:
        n_steps = 2
    tb = pl.cdiv(R, n_steps)
    tb = min(((tb + 7) // 8) * 8, R)
    grid = (pl.cdiv(R, tb),)            # partial last block is fine: per-row math only

    act_dtype = jnp.bfloat16 if dtype == jnp.bfloat16 else jnp.float32

    out_r = pl.pallas_call(
        functools.partial(_feature_attention_kernel, act_dtype=act_dtype),
        out_shape=jax.ShapeDtypeStruct((R, GD), dtype),
        grid_spec=pltpu.PrefetchScalarGridSpec(
            num_scalar_prefetch=0,
            grid=grid,
            in_specs=[
                pl.BlockSpec((tb, GD), lambda i: (i, 0)),   # x tile, double-buffered pipeline
                pl.BlockSpec((GD, GH), lambda i: (0, 0)),   # W1_bd resident across all steps
                pl.BlockSpec((1, GH), lambda i: (0, 0)),    # b1 resident (f32)
                pl.BlockSpec((GH, GD), lambda i: (0, 0)),   # W2_bd resident
                pl.BlockSpec((1, GD), lambda i: (0, 0)),    # b2 resident (f32)
            ],
            out_specs=pl.BlockSpec((tb, GD), lambda i: (i, 0)),
        ),
        compiler_params=pltpu.CompilerParams(
            dimension_semantics=("parallel",),              # megacore split on v7x
            vmem_limit_bytes=32 * 1024 * 1024,
        ),
    )(xr, w1_bd, b1_bd, w2_bd, b2_bd)

    out = out_r.reshape(B_pad, D)
    if B_pad != B:
        out = out[:B]
    return out.reshape(orig_shape)


if __name__ == "__main__":
    IN_DIM, REDUCTION = 32, 4
    HIDDEN = IN_DIM // REDUCTION

    key = jax.random.PRNGKey(0)
    kx, k1, k2, k3, k4, kb = jax.random.split(key, 6)

    # Deterministic synthetic parameters in PyTorch nn.Linear layout.
    bound1 = 1.0 / (IN_DIM ** 0.5)
    bound2 = 1.0 / (HIDDEN ** 0.5)
    w1 = jax.random.uniform(k1, (HIDDEN, IN_DIM), jnp.float32, -bound1, bound1)
    b1 = jax.random.uniform(k2, (HIDDEN,), jnp.float32, -bound1, bound1)
    w2 = jax.random.uniform(k3, (IN_DIM, HIDDEN), jnp.float32, -bound2, bound2)
    b2 = jax.random.uniform(k4, (IN_DIM,), jnp.float32, -bound2, bound2)

    def reference(x, w1, b1, w2, b2):
        # PyTorch semantics: Linear(x) = x @ W.T + b
        h = jnp.maximum(x @ w1.T + b1, 0.0)
        a = jax.nn.sigmoid(h @ w2.T + b2)
        return x * a + x

    # f32 Pallas-vs-XLA tolerances are set to cover backend-default MXU/XLA f32 matmul pass
    # counts (the two sides may legitimately differ by ~1e-3 if either uses bf16 passes).
    F32_TOL = dict(atol=5e-3, rtol=5e-3)

    # --- 1) Module-native tiny shape (B=8), f32: routed to the fused-XLA fast path ---
    B_small = 8
    x_small = jax.random.normal(kx, (B_small, IN_DIM), dtype=jnp.float32)
    out_small = jax.block_until_ready(feature_attention(x_small, w1, b1, w2, b2))
    ref_small = reference(x_small, w1, b1, w2, b2)
    assert out_small.shape == (B_small, IN_DIM)
    assert jnp.allclose(out_small, ref_small, atol=1e-5, rtol=1e-5), "f32 tiny (fast path) mismatch"

    # --- 2) Same tiny shape forced through the Pallas kernel (single full-extent block) ---
    out_small_pl = jax.block_until_ready(
        feature_attention(x_small, w1, b1, w2, b2, min_pallas_batch=0))
    assert out_small_pl.shape == (B_small, IN_DIM)
    assert jnp.allclose(out_small_pl, ref_small, **F32_TOL), "f32 tiny (pallas) mismatch"

    # --- 3) Larger batch, f32: 2-step grid, partial last block, batch padded 1302 -> 1304 ---
    B_big = 1302
    x_big = jax.random.normal(kb, (B_big, IN_DIM), dtype=jnp.float32)
    out_big = jax.block_until_ready(feature_attention(x_big, w1, b1, w2, b2))
    ref_big = reference(x_big, w1, b1, w2, b2)
    assert out_big.shape == (B_big, IN_DIM)
    assert jnp.allclose(out_big, ref_big, **F32_TOL), "f32 big mismatch"

    # --- 4) bf16 storage path: bf16 in/out, f32 matmul accumulate, bf16 sigmoid/gating ---
    B_bf = 1280
    x_bf = jax.random.normal(kb, (B_bf, IN_DIM), dtype=jnp.float32).astype(jnp.bfloat16)
    w1b, b1b = w1.astype(jnp.bfloat16), b1.astype(jnp.bfloat16)
    w2b, b2b = w2.astype(jnp.bfloat16), b2.astype(jnp.bfloat16)
    out_bf = jax.block_until_ready(feature_attention(x_bf, w1b, b1b, w2b, b2b))
    ref_bf = reference(x_bf.astype(jnp.float32), w1b.astype(jnp.float32),
                       b1b.astype(jnp.float32), w2b.astype(jnp.float32),
                       b2b.astype(jnp.float32))
    assert out_bf.dtype == jnp.bfloat16
    assert out_bf.shape == (B_bf, IN_DIM)
    assert jnp.allclose(out_bf.astype(jnp.float32), ref_bf, atol=1e-1, rtol=1e-1), "bf16 mismatch"

    print("KERNEL_OK")
</pallas_src>

<mosaic_0001>
module attributes {stable_mosaic.version = 11 : i64} {
  func.func @_feature_attention_kernel(%arg0: i32, %arg1: memref<2x128xf32, #tpu.memory_space<vmem>>, %arg2: memref<128x32xf32, #tpu.memory_space<vmem>>, %arg3: memref<1x32xf32, #tpu.memory_space<vmem>>, %arg4: memref<32x128xf32, #tpu.memory_space<vmem>>, %arg5: memref<1x128xf32, #tpu.memory_space<vmem>>, %arg6: memref<2x128xf32, #tpu.memory_space<vmem>>) attributes {dimension_semantics = [#tpu.dimension_semantics<parallel>], iteration_bounds = array<i64: 1>, scalar_prefetch = 0 : i64, scratch_operands = 0 : i64, tpu.core_type = #tpu.core_type<tc>, window_params = [{transform_indices = @transform_0, window_bounds = array<i64: 2, 128>}, {pipeline_mode = #tpu.pipeline_mode<synchronous>, transform_indices = @transform_1, window_bounds = array<i64: 128, 32>}, {pipeline_mode = #tpu.pipeline_mode<synchronous>, transform_indices = @transform_2, window_bounds = array<i64: 1, 32>}, {pipeline_mode = #tpu.pipeline_mode<synchronous>, transform_indices = @transform_3, window_bounds = array<i64: 32, 128>}, {pipeline_mode = #tpu.pipeline_mode<synchronous>, transform_indices = @transform_4, window_bounds = array<i64: 1, 128>}, {transform_indices = @transform_5, window_bounds = array<i64: 2, 128>}]} {
    %c0 = arith.constant 0 : index
    %c0_0 = arith.constant 0 : index
    %0 = vector.load %arg1[%c0, %c0_0] : memref<2x128xf32, #tpu.memory_space<vmem>>, vector<2x128xf32>
    %c0_1 = arith.constant 0 : index
    %c0_2 = arith.constant 0 : index
    %1 = vector.load %arg2[%c0_1, %c0_2] : memref<128x32xf32, #tpu.memory_space<vmem>>, vector<128x32xf32>
    %cst = arith.constant dense<0.000000e+00> : vector<2x32xf32>
    %2 = tpu.matmul %0, %1, %cst {dimension_numbers = #tpu.dot_dimension_numbers<[1], [0], [0], [1], [0, 0, 1, 1], [], []>} : vector<2x128xf32>, vector<128x32xf32>, vector<2x32xf32> -> vector<2x32xf32>
    %c0_3 = arith.constant 0 : index
    %c0_4 = arith.constant 0 : index
    %3 = vector.load %arg3[%c0_3, %c0_4] : memref<1x32xf32, #tpu.memory_space<vmem>>, vector<1x32xf32>
    %4 = vector.broadcast %3 : vector<1x32xf32> to vector<2x32xf32>
    %5 = arith.addf %2, %4 : vector<2x32xf32>
    %cst_5 = arith.constant 0.000000e+00 : f32
    %6 = vector.broadcast %cst_5 : f32 to vector<2x32xf32>
    %7 = arith.maximumf %5, %6 : vector<2x32xf32>
    %c0_6 = arith.constant 0 : index
    %c0_7 = arith.constant 0 : index
    %8 = vector.load %arg4[%c0_6, %c0_7] : memref<32x128xf32, #tpu.memory_space<vmem>>, vector<32x128xf32>
    %cst_8 = arith.constant dense<0.000000e+00> : vector<2x128xf32>
    %9 = tpu.matmul %7, %8, %cst_8 {dimension_numbers = #tpu.dot_dimension_numbers<[1], [0], [0], [1], [0, 0, 1, 1], [], []>} : vector<2x32xf32>, vector<32x128xf32>, vector<2x128xf32> -> vector<2x128xf32>
    %c0_9 = arith.constant 0 : index
    %c0_10 = arith.constant 0 : index
    %10 = vector.load %arg5[%c0_9, %c0_10] : memref<1x128xf32, #tpu.memory_space<vmem>>, vector<1x128xf32>
    %11 = vector.broadcast %10 : vector<1x128xf32> to vector<2x128xf32>
    %12 = arith.addf %9, %11 : vector<2x128xf32>
    %13 = arith.negf %12 : vector<2x128xf32>
    %14 = math.exp %13 : vector<2x128xf32>
    %cst_11 = arith.constant 1.000000e+00 : f32
    %15 = vector.broadcast %cst_11 : f32 to vector<2x128xf32>
    %16 = arith.addf %15, %14 : vector<2x128xf32>
    %17 = arith.divf %15, %16 : vector<2x128xf32>
    %cst_12 = arith.constant 1.000000e+00 : f32
    %18 = vector.broadcast %cst_12 : f32 to vector<2x128xf32>
    %19 = arith.addf %17, %18 : vector<2x128xf32>
    %20 = arith.mulf %0, %19 : vector<2x128xf32>
    %c0_13 = arith.constant 0 : index
    %c0_14 = arith.constant 0 : index
    %21 = vector.load %arg6[%c0_13, %c0_14] : memref<2x128xf32, #tpu.memory_space<vmem>>, vector<2x128xf32>
    tpu.vector_store %arg6[%c0_13, %c0_14], %20 {strides = array<i32>} : memref<2x128xf32, #tpu.memory_space<vmem>>, vector<2x128xf32>,
    return
  }
  func.func @transform_0(%arg0: i32) -> (i32, i32) {
    %c0_i32 = arith.constant 0 : i32
    %c0_i32_0 = arith.constant 0 : i32
    return %arg0, %c0_i32 : i32, i32
  }
  func.func @transform_1(%arg0: i32) -> (i32, i32) {
    %c0_i32 = arith.constant 0 : i32
    %c0_i32_0 = arith.constant 0 : i32
    %c0_i32_1 = arith.constant 0 : i32
    return %c0_i32, %c0_i32_0 : i32, i32
  }
  func.func @transform_2(%arg0: i32) -> (i32, i32) {
    %c0_i32 = arith.constant 0 : i32
    %c0_i32_0 = arith.constant 0 : i32
    %c0_i32_1 = arith.constant 0 : i32
    return %c0_i32, %c0_i32_0 : i32, i32
  }
  func.func @transform_3(%arg0: i32) -> (i32, i32) {
    %c0_i32 = arith.constant 0 : i32
    %c0_i32_0 = arith.constant 0 : i32
    %c0_i32_1 = arith.constant 0 : i32
    return %c0_i32, %c0_i32_0 : i32, i32
  }
  func.func @transform_4(%arg0: i32) -> (i32, i32) {
    %c0_i32 = arith.constant 0 : i32
    %c0_i32_0 = arith.constant 0 : i32
    %c0_i32_1 = arith.constant 0 : i32
    return %c0_i32, %c0_i32_0 : i32, i32
  }
  func.func @transform_5(%arg0: i32) -> (i32, i32) {
    %c0_i32 = arith.constant 0 : i32
    %c0_i32_0 = arith.constant 0 : i32
    return %arg0, %c0_i32 : i32, i32
  }
}

</mosaic_0001>

<llo_original>
// kernel: tpu_custom_call.1
$region0: #{tpu_custom_call.1}
  #allocation0 [shape = 'u32[]', space=smem, size = 0x4, offset = 0x4, fixed_abs, tag = 'smem constant byte address 0x4 - core index']
  #allocation1 [shape = 'u32[144,128]{1,0:T(1,128)}', space=vmem, size = 0x12000, scoped, tag = 'internal scratch']
  %s0 = inlined_call_operand.vmem [shape: f32[2,128], index: 0, kind: input, shape index: {}]
  %s1 = inlined_call_operand.vmem [shape: f32[128,32], index: 1, kind: input, shape index: {}]
  %s2 = inlined_call_operand.vmem [shape: f32[1,32], index: 2, kind: input, shape index: {}]
  %s3 = inlined_call_operand.vmem [shape: f32[32,128], index: 3, kind: input, shape index: {}]
  %s4 = inlined_call_operand.vmem [shape: f32[1,128], index: 4, kind: input, shape index: {}]
  %s5 = inlined_call_operand.hbm [shape: f32[2,128], index: 5, kind: output, shape index: {}]
  %s6 = sld [smem:[#allocation0]]
  $region30: #{tpu_custom_call.1} parent=0
    _
  %s8 = ssub.s32 1, %s6
  %s9 = scalar_select 0, %s8, %s6
  $region1: #{tpu_custom_call.1} parent=0
    #allocation2 [shape = 'u8[1024]{0}', space=vmem, size = 0x400, scoped, tag = 'output window, operand 0, single buffered']
    #allocation3 [shape = 's32[1]{0}', space=sflag, size = 0x4, scoped, tag = 'scoped memory for tpu_custom_call.1']
    %10 = vsyncpa [#allocation3], 0
    // Predicated region
    $region2: #{tpu_custom_call.1} parent=1 // pred_check
      _
    $region3: #{tpu_custom_call.1} parent=1 // pred_check_branch
      %12 = sbr.rel (0) target = $region5
    $region4: #{tpu_custom_call.1} parent=1 // pred_region
      _
    $region5: #{tpu_custom_call.1} parent=1 // pred_fallthru
      _
    // Predicated region
    $region6: #{tpu_custom_call.1} parent=1 // pred_check
      _
    $region7: #{tpu_custom_call.1} parent=1 // pred_check_branch
      %14 = sbr.rel (0) target = $region9
    $region8: #{tpu_custom_call.1} parent=1 // pred_region
      _
    $region9: #{tpu_custom_call.1} parent=1 // pred_fallthru
      _
    // Predicated region
    $region10: #{tpu_custom_call.1} parent=1 // pred_check
      _
    $region11: #{tpu_custom_call.1} parent=1 // pred_check_branch
      %16 = sbr.rel (0) target = $region13
    $region12: #{tpu_custom_call.1} parent=1 // pred_region
      _
    $region13: #{tpu_custom_call.1} parent=1 // pred_fallthru
      _
    // Predicated region
    $region14: #{tpu_custom_call.1} parent=1 // pred_check
      _
    $region15: #{tpu_custom_call.1} parent=1 // pred_check_branch
      %18 = sbr.rel (0) target = $region17
    $region16: #{tpu_custom_call.1} parent=1 // pred_region
      _
    $region17: #{tpu_custom_call.1} parent=1 // pred_fallthru
      _
    // Predicated region
    $region18: #{tpu_custom_call.1} parent=1 // pred_check
      _
    $region19: #{tpu_custom_call.1} parent=1 // pred_check_branch
      %20 = sbr.rel (0) target = $region21
    $region20: #{tpu_custom_call.1} parent=1 // pred_region
      _
    $region21: #{tpu_custom_call.1} parent=1 // pred_fallthru
      _
    %v21 = vld [vmem:[%s0] sm:$0x3]
    %v22 = vld [vmem:[%s1] sm:$0xff]
    %v23 = vld [vmem:[%s1 + $0x8] sm:$0xff]
    %v24 = vld [vmem:[%s1 + $0x10] sm:$0xff]
    %v25 = vld [vmem:[%s1 + $0x18] sm:$0xff]
    %v26 = vld [vmem:[%s1 + $0x20] sm:$0xff]
    %v27 = vld [vmem:[%s1 + $0x28] sm:$0xff]
    %v28 = vld [vmem:[%s1 + $0x30] sm:$0xff]
    %v29 = vld [vmem:[%s1 + $0x38] sm:$0xff]
    %v30 = vld [vmem:[%s1 + $0x40] sm:$0xff]
    %v31 = vld [vmem:[%s1 + $0x48] sm:$0xff]
    %v32 = vld [vmem:[%s1 + $0x50] sm:$0xff]
    %v33 = vld [vmem:[%s1 + $0x58] sm:$0xff]
    %v34 = vld [vmem:[%s1 + $0x60] sm:$0xff]
    %v35 = vld [vmem:[%s1 + $0x68] sm:$0xff]
    %v36 = vld [vmem:[%s1 + $0x70] sm:$0xff]
    %v37 = vld [vmem:[%s1 + $0x78] sm:$0xff]
    %v38 = vld [vmem:[%s2] sm:$0x1]
    %v40 = vlaneseq
    %v41 = vshrl.u32 %v40, 7
    %v42 = vsub.s32 0, %v41
    %v43 = vrot.slane %v38, %v42
    %45 = vmatprep.subr.mxu0 0.0
    %46 = vmatpush1.msra.mxu0 %v22
    %47 = vmatprep.subr.mxu0 0.0
    %48 = vmatpush1.msra.mxu0 %v23
    %49 = vmatprep.subr.mxu0 0.0
    %50 = vmatpush1.msra.mxu0 %v24
    %51 = vmatprep.subr.mxu0 0.0
    %52 = vmatpush1.msra.mxu0 %v25
    %53 = vmatprep.subr.mxu0 0.0
    %54 = vmatpush1.msra.mxu0 %v26
    %55 = vmatprep.subr.mxu0 0.0
    %56 = vmatpush1.msra.mxu0 %v27
    %57 = vmatprep.subr.mxu0 0.0
    %58 = vmatpush1.msra.mxu0 %v28
    %59 = vmatprep.subr.mxu0 0.0
    %60 = vmatpush1.msra.mxu0 %v29
    %61 = vmatprep.subr.mxu0 0.0
    %62 = vmatpush1.msra.mxu0 %v30
    %63 = vmatprep.subr.mxu0 0.0
    %64 = vmatpush1.msra.mxu0 %v31
    %65 = vmatprep.subr.mxu0 0.0
    %66 = vmatpush1.msra.mxu0 %v32
    %67 = vmatprep.subr.mxu0 0.0
    %68 = vmatpush1.msra.mxu0 %v33
    %69 = vmatprep.subr.mxu0 0.0
    %70 = vmatpush1.msra.mxu0 %v34
    %71 = vmatprep.subr.mxu0 0.0
    %72 = vmatpush1.msra.mxu0 %v35
    %73 = vmatprep.subr.mxu0 0.0
    %74 = vmatpush1.msra.mxu0 %v36
    %75 = vmatprep.subr.mxu0 0.0
    %76 = vmatpush1.msra.mxu0 %v37
    %77 = vmatprep.subr.mxu0 0.0
    %78 = vmatpush1.msra.mxu0 0.0
    %79 = vmatprep.subr.mxu0 0.0
    %80 = vmatpush1.msra.mxu0 0.0
    %81 = vmatprep.subr.mxu0 0.0
    %82 = vmatpush1.msra.mxu0 0.0
    %83 = vmatprep.subr.mxu0 0.0
    %84 = vmatpush1.msra.mxu0 0.0
    %85 = vmatprep.subr.mxu0 0.0
    %86 = vmatpush1.msra.mxu0 0.0
    %87 = vmatprep.subr.mxu0 0.0
    %88 = vmatpush1.msra.mxu0 0.0
    %89 = vmatprep.subr.mxu0 0.0
    %90 = vmatpush1.msra.mxu0 0.0
    %91 = vmatprep.subr.mxu0 0.0
    %92 = vmatpush1.msra.mxu0 0.0
    %93 = vmatprep.subr.mxu0 0.0
    %94 = vmatpush1.msra.mxu0 0.0
    %95 = vmatprep.subr.mxu0 0.0
    %96 = vmatpush1.msra.mxu0 0.0
    %97 = vmatprep.subr.mxu0 0.0
    %98 = vmatpush1.msra.mxu0 0.0
    %99 = vmatprep.subr.mxu0 0.0
    %100 = vmatpush1.msra.mxu0 0.0
    %101 = vmatprep.subr.mxu0 0.0
    %102 = vmatpush1.msra.mxu0 0.0
    %103 = vmatprep.subr.mxu0 0.0
    %104 = vmatpush1.msra.mxu0 0.0
    %105 = vmatprep.subr.mxu0 0.0
    %106 = vmatpush1.msra.mxu0 0.0
    %107 = vmatprep.subr.mxu0 0.0
    %108 = vmatpush1.msra.mxu0 0.0
    %109 = vmatprep.mubr.f32.mxu0 0.0
    %110 = vmatmul.mubr.f32.gmra.mrb[0].mxu0 %v21
    %v111 = vpop.f32.mrb[0].mxu0
    %v112 = vadd.f32 %v43, %v111
    %v113 = vpop.f32.mrb[0].mxu0
    %114 = vdwg.mxu0
    %v115 = vmax.f32 %v112, 0.0
    %v116 = vld [vmem:[%s3] sm:$0xff]
    %v117 = vld [vmem:[%s3 + $0x8] sm:$0xff]
    %v118 = vld [vmem:[%s3 + $0x10] sm:$0xff]
    %v119 = vld [vmem:[%s3 + $0x18] sm:$0xff]
    %v120 = vld [vmem:[%s4] sm:$0x1]
    %v122 = vlaneseq
    %v123 = vshrl.u32 %v122, 7
    %v124 = vsub.s32 0, %v123
    %v125 = vrot.slane %v120, %v124
    %vm127 = vcmask 261120
    %v129 = vsel %vm127, %v115, 0
    %131 = vmatprep.subr.mxu0 0.0
    %132 = vmatpush1.msra.mxu0 %v116
    %133 = vmatprep.subr.mxu0 0.0
    %134 = vmatpush1.msra.mxu0 %v117
    %135 = vmatprep.subr.mxu0 0.0
    %136 = vmatpush1.msra.mxu0 %v118
    %137 = vmatprep.subr.mxu0 0.0
    %138 = vmatpush1.msra.mxu0 %v119
    %139 = vmatprep.subr.mxu0 0.0
    %140 = vmatpush1.msra.mxu0 0.0
    %141 = vmatprep.subr.mxu0 0.0
    %142 = vmatpush1.msra.mxu0 0.0
    %143 = vmatprep.subr.mxu0 0.0
    %144 = vmatpush1.msra.mxu0 0.0
    %145 = vmatprep.subr.mxu0 0.0
    %146 = vmatpush1.msra.mxu0 0.0
    %147 = vmatprep.subr.mxu0 0.0
    %148 = vmatpush1.msra.mxu0 0.0
    %149 = vmatprep.subr.mxu0 0.0
    %150 = vmatpush1.msra.mxu0 0.0
    %151 = vmatprep.subr.mxu0 0.0
    %152 = vmatpush1.msra.mxu0 0.0
    %153 = vmatprep.subr.mxu0 0.0
    %154 = vmatpush1.msra.mxu0 0.0
    %155 = vmatprep.subr.mxu0 0.0
    %156 = vmatpush1.msra.mxu0 0.0
    %157 = vmatprep.subr.mxu0 0.0
    %158 = vmatpush1.msra.mxu0 0.0
    %159 = vmatprep.subr.mxu0 0.0
    %160 = vmatpush1.msra.mxu0 0.0
    %161 = vmatprep.subr.mxu0 0.0
    %162 = vmatpush1.msra.mxu0 0.0
    %163 = vmatprep.subr.mxu0 0.0
    %164 = vmatpush1.msra.mxu0 0.0
    %165 = vmatprep.subr.mxu0 0.0
    %166 = vmatpush1.msra.mxu0 0.0
    %167 = vmatprep.subr.mxu0 0.0
    %168 = vmatpush1.msra.mxu0 0.0
    %169 = vmatprep.subr.mxu0 0.0
    %170 = vmatpush1.msra.mxu0 0.0
    %171 = vmatprep.subr.mxu0 0.0
    %172 = vmatpush1.msra.mxu0 0.0
    %173 = vmatprep.subr.mxu0 0.0
    %174 = vmatpush1.msra.mxu0 0.0
    %175 = vmatprep.subr.mxu0 0.0
    %176 = vmatpush1.msra.mxu0 0.0
    %177 = vmatprep.subr.mxu0 0.0
    %178 = vmatpush1.msra.mxu0 0.0
    %179 = vmatprep.subr.mxu0 0.0
    %180 = vmatpush1.msra.mxu0 0.0
    %181 = vmatprep.subr.mxu0 0.0
    %182 = vmatpush1.msra.mxu0 0.0
    %183 = vmatprep.subr.mxu0 0.0
    %184 = vmatpush1.msra.mxu0 0.0
    %185 = vmatprep.subr.mxu0 0.0
    %186 = vmatpush1.msra.mxu0 0.0
    %187 = vmatprep.subr.mxu0 0.0
    %188 = vmatpush1.msra.mxu0 0.0
    %189 = vmatprep.subr.mxu0 0.0
    %190 = vmatpush1.msra.mxu0 0.0
    %191 = vmatprep.subr.mxu0 0.0
    %192 = vmatpush1.msra.mxu0 0.0
    %193 = vmatprep.subr.mxu0 0.0
    %194 = vmatpush1.msra.mxu0 0.0
    %195 = vmatprep.mubr.f32.mxu0 0.0
    %196 = vmatmul.mubr.f32.gmra.mrb[0].mxu0 %v129
    %v197 = vpop.f32.mrb[0].mxu0
    %v198 = vadd.f32 %v125, %v197
    %v199 = vpop.f32.mrb[0].mxu0
    %200 = vdwg.mxu0
    %v201 = vxor.u32 %v198, 2147483648
    %v202 = vmul.f32 %v201, 1.442695
    %v203 = vpow.pop %v202
    %v204 = vadd.f32 %v203, 1.0
    %v205 = vrcp.pop %v204
    %v206 = vmul.f32 1.0, %v205
    %v207 = vadd.f32 %v206, 1.0
    %v208 = vmul.f32 %v21, %v207
    %209 = vst [vmem:[#allocation2] sm:$0x3] %v208
    // Predicated region
    $region22: #{tpu_custom_call.1} parent=1 // pred_check
      _
    $region23: #{tpu_custom_call.1} parent=1 // pred_check_branch
      %211 = sbr.rel (0) target = $region25
    $region24: #{tpu_custom_call.1} parent=1 // pred_region
      %s213 = ssub.s32 32, 32
      %214 = vsyncadd [#allocation3], %s213
      %s216 = sshll.u32 [#allocation2], 4
      %s217 = int_to_ptr.vmem [resolvable:$true] %s216
      %219 = dma.vmem_to_hbm [thread:$0]  %s217, 32, %s5, [#allocation3]
    $region25: #{tpu_custom_call.1} parent=1 // pred_fallthru
      _
    // Predicated region
    $region26: #{tpu_custom_call.1} parent=1 // pred_check
      _
    $region27: #{tpu_custom_call.1} parent=1 // pred_check_branch
      %221 = sbr.rel (0) target = $region29
    $region28: #{tpu_custom_call.1} parent=1 // pred_region
      %222 = dma.done [#allocation3], 32
    $region29: #{tpu_custom_call.1} parent=1 // pred_fallthru
      _
    %223 = vsyncpa [#allocation3], 1

</llo_original>
